<compile_context>
chip_gen: v5e
topology: v5e:2x2
jax: 0.10.0
libtpu: 0.0.40
codegen_flags: <defaults>
</compile_context>

<pallas_src>
import jax
import jax.numpy as jnp
from jax.experimental import pallas as pl
from jax.experimental.pallas import tpu as pltpu


def _round_up(n, m):
    return ((n + m - 1) // m) * m


def classifier_kernel(x_ref, w1_ref, b1_ref, w2_ref, b2_ref, o_ref):
    # x: (tile_b, F_in) bf16 ; w1: (F_in, H) bf16 ; b1: (1, H) f32
    # w2: (H, F_out)   bf16 ; b2: (1, F_out) f32 ; o: (tile_b, F_out) f32

    # lin1 + relu  (dropout p=0.0 -> identity).  MXU in bf16, accumulate f32.
    h = jnp.dot(x_ref[...], w1_ref[...], preferred_element_type=jnp.float32)
    h = jnp.maximum(h + b1_ref[...], 0.0)

    # lin2 (bf16 operands, f32 accumulation).
    logits = jnp.dot(h.astype(jnp.bfloat16), w2_ref[...],
                     preferred_element_type=jnp.float32) + b2_ref[...]

    # Numerically-stable log_softmax along the last axis (all f32).
    m = jnp.max(logits, axis=-1, keepdims=True)
    shifted = logits - m
    lse = jnp.log(jnp.sum(jnp.exp(shifted), axis=-1, keepdims=True))
    o_ref[...] = (shifted - lse).astype(o_ref.dtype)


def classifier_forward(x, w1_t, b1, w2_t, b2, *, tile_b=None):
    """x: (B, F_in); w1_t: (F_in, H); b1: (1, H); w2_t: (H, F_out); b2: (1, F_out)."""
    B, F_in = x.shape
    H = w1_t.shape[1]
    F_out = w2_t.shape[1]

    # bf16 MXU operands (halves streamed-activation / resident-weight bytes);
    # biases and all in-kernel elementwise math stay f32.
    x_bf = x.astype(jnp.bfloat16)
    w1_bf = w1_t.astype(jnp.bfloat16)
    w2_bf = w2_t.astype(jnp.bfloat16)
    b1_f = b1.astype(jnp.float32)
    b2_f = b2.astype(jnp.float32)

    if tile_b is None:
        # Large tiles amortize per-step overhead; cap at half the batch (when B
        # allows) so v7x's two TensorCores each get >= 1 parallel grid step.
        per_core = _round_up(pl.cdiv(B, 2), 8) if B >= 16 else _round_up(B, 8)
        tile_b = min(2048, per_core)
    tile_b = max(8, _round_up(tile_b, 8))

    # Keep double-buffered activation tiles + resident weights well inside the
    # scoped-VMEM limit on every generation (budget ~12 MiB << 32 MiB limit).
    def _vmem_bytes(tb):
        act = 2 * tb * F_in * 2 + 2 * tb * F_out * 4      # double-buffered x / out
        mid = 2 * tb * H * 4                              # f32 hidden + headroom
        wgt = 2 * ((F_in * H + H * F_out) * 2 + (H + F_out) * 4)
        return act + mid + wgt

    while tile_b > 8 and _vmem_bytes(tile_b) > (12 << 20):
        tile_b = max(8, _round_up(tile_b // 2, 8))

    grid = (pl.cdiv(B, tile_b),)  # ragged last tile handled by Pallas boundary blocks

    cost = pl.CostEstimate(
        flops=2 * B * (F_in * H + H * F_out),
        transcendentals=B * F_out,
        bytes_accessed=(B * F_in * 2 + B * F_out * 4
                        + (F_in * H + H * F_out) * 2 + (H + F_out) * 4),
    )

    return pl.pallas_call(
        classifier_kernel,
        out_shape=jax.ShapeDtypeStruct((B, F_out), jnp.float32),
        grid_spec=pltpu.PrefetchScalarGridSpec(
            num_scalar_prefetch=0,
            grid=grid,
            in_specs=[
                # Activation tile streams over the batch grid axis; last dim is
                # the real F_in (== full array dim, so no 128-padding needed).
                pl.BlockSpec((tile_b, F_in), lambda i: (i, 0)),
                # Weights / biases: constant index_map -> DMA'd once and kept
                # VMEM-resident across all grid steps.
                # TODO(synk): for very large H on v7x, consider
                # pipeline_mode=pl.Buffered(1) on these constant blocks to drop
                # the redundant second buffer from the 64 MiB VMEM budget.
                pl.BlockSpec((F_in, H), lambda i: (0, 0)),
                pl.BlockSpec((1, H), lambda i: (0, 0)),
                pl.BlockSpec((H, F_out), lambda i: (0, 0)),
                pl.BlockSpec((1, F_out), lambda i: (0, 0)),
            ],
            out_specs=pl.BlockSpec((tile_b, F_out), lambda i: (i, 0)),
        ),
        compiler_params=pltpu.CompilerParams(
            dimension_semantics=("parallel",),
            vmem_limit_bytes=32 << 20,
        ),
        cost_estimate=cost,
    )(x_bf, w1_bf, b1_f, w2_bf, b2_f)


def init_params(key, input_features, hidden_features, output_features):
    """Deterministic init mimicking nn.Linear's uniform(-1/sqrt(fan_in), 1/sqrt(fan_in))."""
    k1, k2, k3, k4 = jax.random.split(key, 4)
    bound1 = 1.0 / (input_features ** 0.5)
    bound2 = 1.0 / (hidden_features ** 0.5)
    # PyTorch stores (out, in); we build the transposed (in, out) directly.
    w1_t = jax.random.uniform(k1, (input_features, hidden_features),
                              jnp.float32, -bound1, bound1)
    b1 = jax.random.uniform(k2, (1, hidden_features), jnp.float32, -bound1, bound1)
    w2_t = jax.random.uniform(k3, (hidden_features, output_features),
                              jnp.float32, -bound2, bound2)
    b2 = jax.random.uniform(k4, (1, output_features), jnp.float32, -bound2, bound2)
    return w1_t, b1, w2_t, b2


if __name__ == "__main__":
    # Small shapes consistent with the module's forward: (batch, input_features)
    batch = 8
    input_features = 32
    hidden_features = 64
    output_features = 16

    key = jax.random.PRNGKey(0)
    kx, kp = jax.random.split(key)
    x = jax.random.normal(kx, (batch, input_features), jnp.float32)
    w1_t, b1, w2_t, b2 = init_params(kp, input_features, hidden_features, output_features)

    out = classifier_forward(x, w1_t, b1, w2_t, b2)
    out = jax.block_until_ready(out)

    # Reference mirroring the kernel's precision (bf16 MXU operands,
    # f32 accumulation and f32 elementwise / log-softmax).
    h_ref = jnp.maximum(
        jnp.dot(x.astype(jnp.bfloat16), w1_t.astype(jnp.bfloat16),
                preferred_element_type=jnp.float32) + b1, 0.0)
    logits_ref = jnp.dot(h_ref.astype(jnp.bfloat16), w2_t.astype(jnp.bfloat16),
                         preferred_element_type=jnp.float32) + b2
    ref = jax.nn.log_softmax(logits_ref, axis=-1)

    assert out.shape == ref.shape, "shape mismatch vs reference"
    assert jnp.allclose(out, ref, atol=1e-4, rtol=1e-4), "mismatch vs reference"

    print("KERNEL_OK")
</pallas_src>

<mosaic_0001>
module attributes {stable_mosaic.version = 11 : i64} {
  func.func @classifier_kernel(%arg0: i32, %arg1: memref<8x32xbf16, #tpu.memory_space<vmem>>, %arg2: memref<32x64xbf16, #tpu.memory_space<vmem>>, %arg3: memref<1x64xf32, #tpu.memory_space<vmem>>, %arg4: memref<64x16xbf16, #tpu.memory_space<vmem>>, %arg5: memref<1x16xf32, #tpu.memory_space<vmem>>, %arg6: memref<8x16xf32, #tpu.memory_space<vmem>>) attributes {dimension_semantics = [#tpu.dimension_semantics<parallel>], iteration_bounds = array<i64: 1>, scalar_prefetch = 0 : i64, scratch_operands = 0 : i64, tpu.core_type = #tpu.core_type<tc>, window_params = [{transform_indices = @transform_0, window_bounds = array<i64: 8, 32>}, {pipeline_mode = #tpu.pipeline_mode<synchronous>, transform_indices = @transform_1, window_bounds = array<i64: 32, 64>}, {pipeline_mode = #tpu.pipeline_mode<synchronous>, transform_indices = @transform_2, window_bounds = array<i64: 1, 64>}, {pipeline_mode = #tpu.pipeline_mode<synchronous>, transform_indices = @transform_3, window_bounds = array<i64: 64, 16>}, {pipeline_mode = #tpu.pipeline_mode<synchronous>, transform_indices = @transform_4, window_bounds = array<i64: 1, 16>}, {transform_indices = @transform_5, window_bounds = array<i64: 8, 16>}]} {
    %c0 = arith.constant 0 : index
    %c0_0 = arith.constant 0 : index
    %0 = vector.load %arg1[%c0, %c0_0] : memref<8x32xbf16, #tpu.memory_space<vmem>>, vector<8x32xbf16>
    %c0_1 = arith.constant 0 : index
    %c0_2 = arith.constant 0 : index
    %1 = vector.load %arg2[%c0_1, %c0_2] : memref<32x64xbf16, #tpu.memory_space<vmem>>, vector<32x64xbf16>
    %cst = arith.constant dense<0.000000e+00> : vector<8x64xf32>
    %2 = tpu.matmul %0, %1, %cst {dimension_numbers = #tpu.dot_dimension_numbers<[1], [0], [0], [1], [0, 0, 1, 1], [], []>} : vector<8x32xbf16>, vector<32x64xbf16>, vector<8x64xf32> -> vector<8x64xf32>
    %c0_3 = arith.constant 0 : index
    %c0_4 = arith.constant 0 : index
    %3 = vector.load %arg3[%c0_3, %c0_4] : memref<1x64xf32, #tpu.memory_space<vmem>>, vector<1x64xf32>
    %4 = vector.broadcast %3 : vector<1x64xf32> to vector<8x64xf32>
    %5 = arith.addf %2, %4 : vector<8x64xf32>
    %cst_5 = arith.constant 0.000000e+00 : f32
    %6 = vector.broadcast %cst_5 : f32 to vector<8x64xf32>
    %7 = arith.maximumf %5, %6 : vector<8x64xf32>
    %8 = arith.truncf %7 : vector<8x64xf32> to vector<8x64xbf16>
    %c0_6 = arith.constant 0 : index
    %c0_7 = arith.constant 0 : index
    %9 = vector.load %arg4[%c0_6, %c0_7] : memref<64x16xbf16, #tpu.memory_space<vmem>>, vector<64x16xbf16>
    %cst_8 = arith.constant dense<0.000000e+00> : vector<8x16xf32>
    %10 = tpu.matmul %8, %9, %cst_8 {dimension_numbers = #tpu.dot_dimension_numbers<[1], [0], [0], [1], [0, 0, 1, 1], [], []>} : vector<8x64xbf16>, vector<64x16xbf16>, vector<8x16xf32> -> vector<8x16xf32>
    %c0_9 = arith.constant 0 : index
    %c0_10 = arith.constant 0 : index
    %11 = vector.load %arg5[%c0_9, %c0_10] : memref<1x16xf32, #tpu.memory_space<vmem>>, vector<1x16xf32>
    %12 = vector.broadcast %11 : vector<1x16xf32> to vector<8x16xf32>
    %13 = arith.addf %10, %12 : vector<8x16xf32>
    %cst_11 = arith.constant dense<0xFF800000> : vector<8xf32>
    %14 = vector.multi_reduction <maximumf>, %13, %cst_11 [1] : vector<8x16xf32> to vector<8xf32>
    %15 = vector.shape_cast %14 : vector<8xf32> to vector<8x1xf32>
    %16 = vector.broadcast %15 : vector<8x1xf32> to vector<8x16xf32>
    %17 = arith.subf %13, %16 : vector<8x16xf32>
    %18 = math.exp %17 : vector<8x16xf32>
    %cst_12 = arith.constant dense<0.000000e+00> : vector<8xf32>
    %19 = vector.multi_reduction <add>, %18, %cst_12 [1] : vector<8x16xf32> to vector<8xf32>
    %20 = vector.shape_cast %19 : vector<8xf32> to vector<8x1xf32>
    %21 = math.log %20 : vector<8x1xf32>
    %22 = vector.broadcast %21 : vector<8x1xf32> to vector<8x16xf32>
    %23 = arith.subf %17, %22 : vector<8x16xf32>
    %c0_13 = arith.constant 0 : index
    %c0_14 = arith.constant 0 : index
    %24 = vector.load %arg6[%c0_13, %c0_14] : memref<8x16xf32, #tpu.memory_space<vmem>>, vector<8x16xf32>
    tpu.vector_store %arg6[%c0_13, %c0_14], %23 {strides = array<i32>} : memref<8x16xf32, #tpu.memory_space<vmem>>, vector<8x16xf32>,
    return
  }
  func.func @transform_0(%arg0: i32) -> (i32, i32) {
    %c0_i32 = arith.constant 0 : i32
    %c0_i32_0 = arith.constant 0 : i32
    return %arg0, %c0_i32 : i32, i32
  }
  func.func @transform_1(%arg0: i32) -> (i32, i32) {
    %c0_i32 = arith.constant 0 : i32
    %c0_i32_0 = arith.constant 0 : i32
    %c0_i32_1 = arith.constant 0 : i32
    return %c0_i32, %c0_i32_0 : i32, i32
  }
  func.func @transform_2(%arg0: i32) -> (i32, i32) {
    %c0_i32 = arith.constant 0 : i32
    %c0_i32_0 = arith.constant 0 : i32
    %c0_i32_1 = arith.constant 0 : i32
    return %c0_i32, %c0_i32_0 : i32, i32
  }
  func.func @transform_3(%arg0: i32) -> (i32, i32) {
    %c0_i32 = arith.constant 0 : i32
    %c0_i32_0 = arith.constant 0 : i32
    %c0_i32_1 = arith.constant 0 : i32
    return %c0_i32, %c0_i32_0 : i32, i32
  }
  func.func @transform_4(%arg0: i32) -> (i32, i32) {
    %c0_i32 = arith.constant 0 : i32
    %c0_i32_0 = arith.constant 0 : i32
    %c0_i32_1 = arith.constant 0 : i32
    return %c0_i32, %c0_i32_0 : i32, i32
  }
  func.func @transform_5(%arg0: i32) -> (i32, i32) {
    %c0_i32 = arith.constant 0 : i32
    %c0_i32_0 = arith.constant 0 : i32
    return %arg0, %c0_i32 : i32, i32
  }
}

</mosaic_0001>

<llo_original>
// kernel: tpu_custom_call.1
$region0: #{tpu_custom_call.1}
  #allocation0 [shape = 'u32[]', space=smem, size = 0x4, offset = 0x4, fixed_abs, tag = 'smem constant byte address 0x4 - core index']
  #allocation1 [shape = 'u32[72,128]{1,0:T(1,128)}', space=vmem, size = 0x9000, scoped, tag = 'internal scratch']
  %s0 = inlined_call_operand.vmem [shape: bf16[8,32], index: 0, kind: input, shape index: {}]
  %s1 = inlined_call_operand.vmem [shape: bf16[32,64], index: 1, kind: input, shape index: {}]
  %s2 = inlined_call_operand.vmem [shape: f32[1,64], index: 2, kind: input, shape index: {}]
  %s3 = inlined_call_operand.vmem [shape: bf16[64,16], index: 3, kind: input, shape index: {}]
  %s4 = inlined_call_operand.vmem [shape: f32[1,16], index: 4, kind: input, shape index: {}]
  %s5 = inlined_call_operand.hbm [shape: f32[8,16], index: 5, kind: output, shape index: {}]
  %s6 = sld [smem:[#allocation0]]
  $region30: #{tpu_custom_call.1} parent=0
    _
  %s8 = ssub.s32 1, %s6
  %s9 = scalar_select 0, %s8, %s6
  $region1: #{tpu_custom_call.1} parent=0
    #allocation2 [shape = 'u8[4096]{0}', space=vmem, size = 0x1000, scoped, tag = 'output window, operand 0, single buffered']
    #allocation3 [shape = 's32[1]{0}', space=sflag, size = 0x4, scoped, tag = 'scoped memory for tpu_custom_call.1']
    %10 = vsyncpa [#allocation3], 0
    // Predicated region
    $region2: #{tpu_custom_call.1} parent=1 // pred_check
      _
    $region3: #{tpu_custom_call.1} parent=1 // pred_check_branch
      %12 = sbr.rel (0) target = $region5
    $region4: #{tpu_custom_call.1} parent=1 // pred_region
      _
    $region5: #{tpu_custom_call.1} parent=1 // pred_fallthru
      _
    // Predicated region
    $region6: #{tpu_custom_call.1} parent=1 // pred_check
      _
    $region7: #{tpu_custom_call.1} parent=1 // pred_check_branch
      %14 = sbr.rel (0) target = $region9
    $region8: #{tpu_custom_call.1} parent=1 // pred_region
      _
    $region9: #{tpu_custom_call.1} parent=1 // pred_fallthru
      _
    // Predicated region
    $region10: #{tpu_custom_call.1} parent=1 // pred_check
      _
    $region11: #{tpu_custom_call.1} parent=1 // pred_check_branch
      %16 = sbr.rel (0) target = $region13
    $region12: #{tpu_custom_call.1} parent=1 // pred_region
      _
    $region13: #{tpu_custom_call.1} parent=1 // pred_fallthru
      _
    // Predicated region
    $region14: #{tpu_custom_call.1} parent=1 // pred_check
      _
    $region15: #{tpu_custom_call.1} parent=1 // pred_check_branch
      %18 = sbr.rel (0) target = $region17
    $region16: #{tpu_custom_call.1} parent=1 // pred_region
      _
    $region17: #{tpu_custom_call.1} parent=1 // pred_fallthru
      _
    // Predicated region
    $region18: #{tpu_custom_call.1} parent=1 // pred_check
      _
    $region19: #{tpu_custom_call.1} parent=1 // pred_check_branch
      %20 = sbr.rel (0) target = $region21
    $region20: #{tpu_custom_call.1} parent=1 // pred_region
      _
    $region21: #{tpu_custom_call.1} parent=1 // pred_fallthru
      _
    %v22 = vld [vmem:[%s0] sm:$0xf]
    %v23 = vld [vmem:[%s1] sm:$0xf]
    %v24 = vld [vmem:[%s1 + $0x4] sm:$0xf]
    %v25 = vld [vmem:[%s1 + $0x8] sm:$0xf]
    %v26 = vld [vmem:[%s1 + $0xc] sm:$0xf]
    %v27 = vld [vmem:[%s2] sm:$0x1]
    %v29 = vperm.slane %v27, 0
    %v35 = vunpack.c.l.b16 %v23
    %v36 = vunpack.c.l.b16 %v24
    %v37 = vunpack.c.l.b16 %v25
    %v38 = vunpack.c.l.b16 %v26
    %v39 = vpack.c.b16 %v36, %v35
    %v40 = vpack.c.b16 %v38, %v37
    %vm43 = vcmask 261120
    %v45 = vsel %vm43, %v22, 0
    %47 = vmatpush.bf16.msra.mxu0 0
    %48 = vmatpush.bf16.msra.mxu0 0
    %49 = vmatpush.bf16.msra.mxu0 0
    %50 = vmatpush.bf16.msra.mxu0 0
    %51 = vmatpush.bf16.msra.mxu0 0
    %52 = vmatpush.bf16.msra.mxu0 0
    %53 = vmatpush.bf16.msra.mxu0 %v40
    %54 = vmatpush.bf16.msra.mxu0 %v39
    %55 = vmatmul.bf16.gmra.mxu0 %v45
    %v56 = vpop.f32.mrf.mxu0
    %v57 = vadd.f32 %v29, %v56
    %v58 = vpop.f32.mrf.mxu0
    %59 = vdwg.mxu0
    %v60 = vmax.f32 %v57, 0.0
    %v61 = vpack.c.bf16 %v60, %v60
    %v62 = vld [vmem:[%s3] sm:$0xf]
    %v63 = vld [vmem:[%s3 + $0x4] sm:$0xf]
    %v64 = vld [vmem:[%s3 + $0x8] sm:$0xf]
    %v65 = vld [vmem:[%s3 + $0xc] sm:$0xf]
    %v66 = vld [vmem:[%s3 + $0x10] sm:$0xf]
    %v67 = vld [vmem:[%s3 + $0x14] sm:$0xf]
    %v68 = vld [vmem:[%s3 + $0x18] sm:$0xf]
    %v69 = vld [vmem:[%s3 + $0x1c] sm:$0xf]
    %v70 = vld [vmem:[%s4] sm:$0x1]
    %v72 = vperm.slane %v70, 0
    %v82 = vunpack.c.l.b16 %v62
    %v83 = vunpack.c.l.b16 %v63
    %v84 = vunpack.c.l.b16 %v64
    %v85 = vunpack.c.l.b16 %v65
    %v86 = vunpack.c.l.b16 %v66
    %v87 = vunpack.c.l.b16 %v67
    %v88 = vunpack.c.l.b16 %v68
    %v89 = vunpack.c.l.b16 %v69
    %v90 = vpack.c.b16 %v83, %v82
    %v91 = vpack.c.b16 %v85, %v84
    %v92 = vpack.c.b16 %v87, %v86
    %v93 = vpack.c.b16 %v89, %v88
    %vm98 = vcmask 523264
    %v100 = vsel %vm98, %v61, 0
    %102 = vmatpush.bf16.msra.mxu0 0
    %103 = vmatpush.bf16.msra.mxu0 0
    %104 = vmatpush.bf16.msra.mxu0 0
    %105 = vmatpush.bf16.msra.mxu0 0
    %106 = vmatpush.bf16.msra.mxu0 %v93
    %107 = vmatpush.bf16.msra.mxu0 %v92
    %108 = vmatpush.bf16.msra.mxu0 %v91
    %109 = vmatpush.bf16.msra.mxu0 %v90
    %110 = vmatmul.bf16.gmra.mxu0 %v100
    %v111 = vpop.f32.mrf.mxu0
    %v112 = vadd.f32 %v72, %v111
    %v113 = vpop.f32.mrf.mxu0
    %114 = vdwg.mxu0
    %vm115 = vcmask 130048
    %v116 = vsel %vm115, %v112, -inf
    %117 = vmax.xlane.f32.xlu0 %v116
    %v118 = vpop.xlane.xlu0 %117
    %v119 = vsub.f32 %v112, %v118
    %v120 = vmul.f32 %v119, 1.442695
    %v121 = vpow.pop %v120
    %v122 = vsel %vm115, %v121, 0.0
    %123 = vadd.xlane.f32.xlu0 %v122
    %v124 = vpop.xlane.xlu0 %123
    %v125 = vlog2.pop %v124
    %v126 = vmul.f32 %v125, 0.6931472
    %v127 = vsub.f32 %v119, %v126
    %128 = vst.msk [vmem:[#allocation2] sm:$0xff] %vm115, %v127
    // Predicated region
    $region22: #{tpu_custom_call.1} parent=1 // pred_check
      _
    $region23: #{tpu_custom_call.1} parent=1 // pred_check_branch
      %130 = sbr.rel (0) target = $region25
    $region24: #{tpu_custom_call.1} parent=1 // pred_region
      %132 = vsyncadd [#allocation3], 0
      %s134 = sshll.u32 [#allocation2], 4
      %s135 = int_to_ptr.vmem [resolvable:$true] %s134
      %s136 = sshll.u32 %s5, 4
      %s137 = int_to_ptr.hbm [resolvable:$true] %s136
      %139 = dma.vmem_to_hbm [thread:$0]  %s135, 128, %s137, [#allocation3]
    $region25: #{tpu_custom_call.1} parent=1 // pred_fallthru
      _
    // Predicated region
    $region26: #{tpu_custom_call.1} parent=1 // pred_check
      _
    $region27: #{tpu_custom_call.1} parent=1 // pred_check_branch
      %141 = sbr.rel (0) target = $region29
    $region28: #{tpu_custom_call.1} parent=1 // pred_region
      %143 = dma.done [#allocation3], 128
    $region29: #{tpu_custom_call.1} parent=1 // pred_fallthru
      _
    %144 = vsyncpa [#allocation3], 1

</llo_original>
